<compile_context>
chip_gen: v7x
topology: tpu7x:2x2x1
jax: 0.10.0
libtpu: 0.0.40
codegen_flags: <defaults>
</compile_context>

<pallas_src>
import functools

import jax
import jax.numpy as jnp
from jax import lax
from jax.experimental import pallas as pl
from jax.experimental.pallas import tpu as pltpu


# ---------------------------------------------------------------------------
# helpers
# ---------------------------------------------------------------------------
def _triple(v):
    if isinstance(v, (tuple, list)):
        assert len(v) == 3
        return tuple(int(e) for e in v)
    return (int(v),) * 3


def _round_up(x, m):
    return ((x + m - 1) // m) * m


# ---------------------------------------------------------------------------
# Pallas kernel: per grid step (n, j), loop over d_block output depth planes.
# For each plane, fill a (K, Pt) im2col scratch from the resident full-depth
# activation block and hit it with ONE fused (Cout, K) x (K, Pt) MXU matmul.
# ---------------------------------------------------------------------------
def _make_conv_kernel(d_block, KD, KH, KW, Cin, Wp, Pt, sd):
    def kernel(x_ref, w_ref, o_ref, col_ref):
        # x_ref:   (1, Dp, Cin, Lin)      full padded depth of one batch
        # w_ref:   (Cout, K)              fused lane-dense weight (grid-resident)
        # o_ref:   (1, d_block, Cout, Pt) lane-dense output slabs (Pt % 128 == 0)
        # col_ref: (K, Pt)                im2col scratch for one output plane
        j = pl.program_id(1)
        w = w_ref[...]                    # loop-invariant: load once per step

        def plane(d, carry):
            dout = j * d_block + d
            base = dout * sd              # depth taps are contiguous: base + [0, KD)
            # Build the fused im2col slab. Row order (kh, kw, kd, ci) matches the
            # (Cout, K) weight reshape done in the wrapper.  The lane shifts of
            # the 27 taps are done exactly once, into the scratch.
            for kd in range(KD):
                xpl = x_ref[0, base + kd]                     # (Cin, Lin)
                for kh in range(KH):
                    for kw in range(KW):
                        row = ((kh * KW + kw) * KD + kd) * Cin
                        off = kh * Wp + kw                    # static lane offset
                        col_ref[row:row + Cin, :] = xpl[:, off:off + Pt]
            acc = jnp.dot(w, col_ref[...], preferred_element_type=jnp.float32)
            o_ref[0, d] = acc.astype(o_ref.dtype)
            return carry

        lax.fori_loop(0, d_block, plane, 0, unroll=bool(d_block <= 4))

    return kernel


# ---------------------------------------------------------------------------
# SpatioTemporalConv forward = Conv3d(x) with stride/padding, bias=False.
# ---------------------------------------------------------------------------
def spatio_temporal_conv(x, weight, *, stride=1, padding=0,
                         compute_dtype=jnp.bfloat16):
    """x: (N, Cin, D, H, W); weight: (Cout, Cin, kD, kH, kW).
    Returns (N, Cout, Dout, Hout, Wout) in x.dtype, matching nn.Conv3d(bias=False).
    compute_dtype: MXU input dtype (bf16 default, f32 accumulation either way)."""
    sd, sh, sw = _triple(stride)
    pd, ph, pw = _triple(padding)
    N, Cin, D, H, W = x.shape
    Cout, Cin_w, KD, KH, KW = weight.shape
    assert Cin == Cin_w

    out_dtype = x.dtype
    cdtype = jnp.dtype(compute_dtype) if compute_dtype is not None else jnp.dtype(x.dtype)
    esz_c = cdtype.itemsize
    esz_o = jnp.dtype(out_dtype).itemsize

    Dp, Hp, Wp = D + 2 * pd, H + 2 * ph, W + 2 * pw
    Dout = (Dp - KD) // sd + 1
    Hd, Wd = Hp - KH + 1, Wp - KW + 1           # dense (stride-1) spatial extents
    Hout = (Hd - 1) // sh + 1
    Wout = (Wd - 1) // sw + 1

    P = Hd * Wp                                  # dense flat positions per plane
    Pt = _round_up(P, 128)                       # lane-dense output width
    halo = (KH - 1) * Wp + (KW - 1)              # extra flat input for the last tap
    Lin = _round_up(Pt + halo, 128)
    K = KD * KH * KW * Cin                       # fused contraction depth

    # ---- activation prep: ONE pad+transpose HBM copy (~1x input, no unfold) ----
    xc = x.astype(cdtype)
    xp = jnp.pad(xc, ((0, 0), (0, 0), (pd, pd), (ph, ph), (pw, pw)))
    xp = jnp.transpose(xp, (0, 2, 1, 3, 4)).reshape(N, Dp, Cin, Hp * Wp)
    xflat = jnp.pad(xp, ((0, 0), (0, 0), (0, 0), (0, Lin - Hp * Wp)))

    # weight -> single lane-dense (Cout, K) tile; column order (kh, kw, kd, ci).
    wt = jnp.transpose(weight.astype(cdtype), (0, 3, 4, 2, 1)).reshape(Cout, K)

    # ---- block sizing with explicit VMEM accounting (safe on v5e/v6e/v7x) ----
    x_blk = Dp * Cin * Lin * esz_c               # full-depth activation block
    w_blk = Cout * K * esz_c
    col_blk = K * Pt * esz_c
    plane_out = Cout * Pt * esz_o
    budget = 36 * 1024 * 1024                    # 2x(in+out) + weight + scratch
    d_block = 1
    for db in range(Dout, 0, -1):
        if Dout % db:
            continue
        steps = N * (Dout // db)
        if steps < 2 and N * Dout >= 2:
            continue                             # >=2 steps: pipelining + v7x 2 TCs
        if 2 * (x_blk + db * plane_out) + 2 * w_blk + col_blk <= budget:
            d_block = db
            break
    num_j = Dout // d_block
    # TODO(synk): for very large activations the full-depth (Dp, Cin, Lin) block may
    # exceed VMEM; a blocked-depth variant needs manual halo DMA (pl.ANY + make_async_copy).

    vmem_need = 2 * (x_blk + d_block * plane_out) + 2 * w_blk + col_blk
    vmem_limit = int(min(48 * 1024 * 1024,
                         max(32 * 1024 * 1024, vmem_need + (4 << 20))))

    kernel = _make_conv_kernel(d_block, KD, KH, KW, Cin, Wp, Pt, sd)

    x_spec = pl.BlockSpec((1, Dp, Cin, Lin), lambda n, j: (n, 0, 0, 0))
    w_spec = pl.BlockSpec((Cout, K), lambda n, j: (0, 0))
    o_spec = pl.BlockSpec((1, d_block, Cout, Pt), lambda n, j: (n, j, 0, 0))

    flops = 2 * N * Dout * Cout * K * Pt
    bytes_accessed = (xflat.size * esz_c + wt.size * esz_c
                      + N * Dout * Cout * Pt * esz_o)

    out = pl.pallas_call(
        kernel,
        out_shape=jax.ShapeDtypeStruct((N, Dout, Cout, Pt), out_dtype),
        grid_spec=pltpu.PrefetchScalarGridSpec(
            num_scalar_prefetch=0,
            grid=(N, num_j),
            in_specs=[x_spec, w_spec],
            out_specs=o_spec,
            scratch_shapes=[pltpu.VMEM((K, Pt), cdtype)],
        ),
        compiler_params=pltpu.CompilerParams(
            dimension_semantics=("parallel", "parallel"),
            vmem_limit_bytes=vmem_limit),
        cost_estimate=pl.CostEstimate(
            flops=flops, transcendentals=0, bytes_accessed=bytes_accessed),
    )(xflat, wt)

    # ---- unflatten, drop garbage columns, apply spatial stride, back to NCDHW ----
    # TODO(synk): spatial stride > 1 computes the dense stride-1 plane in-kernel and
    # subsamples here (correct, but sh*sw redundant MXU work for strided layers).
    out = out[:, :, :, :P].reshape(N, Dout, Cout, Hd, Wp)
    out = out[:, :, :, ::sh, :Wd:sw]                      # (N, Dout, Cout, Hout, Wout)
    return jnp.transpose(out, (0, 2, 1, 3, 4))            # (N, Cout, Dout, Hout, Wout)


def init_conv3d_weight(key, in_channels, out_channels, kernel_size):
    """Deterministic init mirroring PyTorch Conv3d default (kaiming_uniform, a=sqrt(5))."""
    kd, kh, kw = kernel_size
    fan_in = in_channels * kd * kh * kw
    bound = 1.0 / jnp.sqrt(jnp.float32(fan_in))
    return jax.random.uniform(
        key, (out_channels, in_channels, kd, kh, kw),
        dtype=jnp.float32, minval=-bound, maxval=bound)


if __name__ == "__main__":
    key = jax.random.PRNGKey(0)
    k_x, k_w = jax.random.split(key)

    # SpatioTemporalConv(in=4, out=8, kernel=3, stride=1, padding=1), bias=False.
    in_channels, out_channels = 4, 8
    kernel_size = (3, 3, 3)
    stride = (1, 1, 1)
    padding = (1, 1, 1)

    # Input NCDHW: batch=2, channels=4, depth=8, spatial 16x16.
    x = jax.random.normal(k_x, (2, in_channels, 8, 16, 16), dtype=jnp.float32)
    w = init_conv3d_weight(k_w, in_channels, out_channels, kernel_size)

    # Reference: XLA's native conv3d (f32).
    ref = jax.lax.conv_general_dilated(
        x, w, window_strides=stride, padding=[(p, p) for p in padding],
        dimension_numbers=("NCDHW", "OIDHW", "NCDHW"))

    # Default path: bf16 MXU inputs, f32 accumulation (recommended on v5e/v6e/v7x).
    fwd = jax.jit(functools.partial(spatio_temporal_conv, stride=stride, padding=padding))
    out = jax.block_until_ready(fwd(x, w))
    assert out.shape == ref.shape == (2, out_channels, 8, 16, 16)
    assert jnp.allclose(out, ref, atol=5e-2, rtol=5e-2)

    # Full-precision compute path — tighter tolerance.
    fwd_f32 = jax.jit(functools.partial(
        spatio_temporal_conv, stride=stride, padding=padding,
        compute_dtype=jnp.float32))
    out_f32 = jax.block_until_ready(fwd_f32(x, w))
    assert jnp.allclose(out_f32, ref, atol=1e-3, rtol=1e-3)

    print("KERNEL_OK")
</pallas_src>

<mosaic_0001>
module attributes {stable_mosaic.version = 11 : i64} {
  func.func @kernel(%arg0: i32, %arg1: i32, %arg2: memref<1x10x4x512xbf16, #tpu.memory_space<vmem>>, %arg3: memref<8x108xbf16, #tpu.memory_space<vmem>>, %arg4: memref<1x8x8x384xf32, #tpu.memory_space<vmem>>, %arg5: memref<108x384xbf16, #tpu.memory_space<vmem>>) attributes {dimension_semantics = [#tpu.dimension_semantics<parallel>, #tpu.dimension_semantics<parallel>], iteration_bounds = array<i64: 2, 1>, scalar_prefetch = 0 : i64, scratch_operands = 1 : i64, tpu.core_type = #tpu.core_type<tc>, window_params = [{transform_indices = @transform_0, window_bounds = array<i64: 1, 10, 4, 512>}, {pipeline_mode = #tpu.pipeline_mode<synchronous>, transform_indices = @transform_1, window_bounds = array<i64: 8, 108>}, {transform_indices = @transform_2, window_bounds = array<i64: 1, 8, 8, 384>}]} {
    %c0 = arith.constant 0 : index
    %c0_0 = arith.constant 0 : index
    %0 = vector.load %arg3[%c0, %c0_0] : memref<8x108xbf16, #tpu.memory_space<vmem>>, vector<8x108xbf16>
    %c0_i32 = arith.constant 0 : i32
    %c8_i32 = arith.constant 8 : i32
    %1 = arith.addi %c0_i32, %c8_i32 : i32
    %c1_i32 = arith.constant 1 : i32
    scf.for %arg6 = %c0_i32 to %1 step %c1_i32  : i32 {
      %c8_i32_2 = arith.constant 8 : i32
      %2 = arith.muli %arg1, %c8_i32_2 : i32
      %3 = arith.addi %2, %arg6 : i32
      %c1_i32_3 = arith.constant 1 : i32
      %4 = arith.muli %3, %c1_i32_3 : i32
      %c0_i32_4 = arith.constant 0 : i32
      %5 = arith.addi %4, %c0_i32_4 : i32
      %c0_5 = arith.constant 0 : index
      %6 = arith.index_cast %5 : i32 to index
      %c0_6 = arith.constant 0 : index
      %c0_7 = arith.constant 0 : index
      %7 = vector.load %arg2[%c0_5, %6, %c0_6, %c0_7] : memref<1x10x4x512xbf16, #tpu.memory_space<vmem>>, vector<1x1x4x512xbf16>
      %8 = vector.shape_cast %7 : vector<1x1x4x512xbf16> to vector<4x512xbf16>
      %9 = vector.extract_strided_slice %8 {offsets = [0, 0], sizes = [4, 384], strides = [1, 1]} : vector<4x512xbf16> to vector<4x384xbf16>
      %c0_8 = arith.constant 0 : index
      %c0_9 = arith.constant 0 : index
      %10 = vector.load %arg5[%c0_8, %c0_9] : memref<108x384xbf16, #tpu.memory_space<vmem>>, vector<4x384xbf16>
      tpu.vector_store %arg5[%c0_8, %c0_9], %9 {strides = array<i32>} : memref<108x384xbf16, #tpu.memory_space<vmem>>, vector<4x384xbf16>,
      %11 = vector.extract_strided_slice %8 {offsets = [0, 1], sizes = [4, 384], strides = [1, 1]} : vector<4x512xbf16> to vector<4x384xbf16>
      %c12 = arith.constant 12 : index
      %c0_10 = arith.constant 0 : index
      %12 = vector.load %arg5[%c12, %c0_10] : memref<108x384xbf16, #tpu.memory_space<vmem>>, vector<4x384xbf16>
      tpu.vector_store %arg5[%c12, %c0_10], %11 {strides = array<i32>} : memref<108x384xbf16, #tpu.memory_space<vmem>>, vector<4x384xbf16>,
      %13 = vector.extract_strided_slice %8 {offsets = [0, 2], sizes = [4, 384], strides = [1, 1]} : vector<4x512xbf16> to vector<4x384xbf16>
      %c24 = arith.constant 24 : index
      %c0_11 = arith.constant 0 : index
      %14 = vector.load %arg5[%c24, %c0_11] : memref<108x384xbf16, #tpu.memory_space<vmem>>, vector<4x384xbf16>
      tpu.vector_store %arg5[%c24, %c0_11], %13 {strides = array<i32>} : memref<108x384xbf16, #tpu.memory_space<vmem>>, vector<4x384xbf16>,
      %15 = vector.extract_strided_slice %8 {offsets = [0, 18], sizes = [4, 384], strides = [1, 1]} : vector<4x512xbf16> to vector<4x384xbf16>
      %c36 = arith.constant 36 : index
      %c0_12 = arith.constant 0 : index
      %16 = vector.load %arg5[%c36, %c0_12] : memref<108x384xbf16, #tpu.memory_space<vmem>>, vector<4x384xbf16>
      tpu.vector_store %arg5[%c36, %c0_12], %15 {strides = array<i32>} : memref<108x384xbf16, #tpu.memory_space<vmem>>, vector<4x384xbf16>,
      %17 = vector.extract_strided_slice %8 {offsets = [0, 19], sizes = [4, 384], strides = [1, 1]} : vector<4x512xbf16> to vector<4x384xbf16>
      %c48 = arith.constant 48 : index
      %c0_13 = arith.constant 0 : index
      %18 = vector.load %arg5[%c48, %c0_13] : memref<108x384xbf16, #tpu.memory_space<vmem>>, vector<4x384xbf16>
      tpu.vector_store %arg5[%c48, %c0_13], %17 {strides = array<i32>} : memref<108x384xbf16, #tpu.memory_space<vmem>>, vector<4x384xbf16>,
      %19 = vector.extract_strided_slice %8 {offsets = [0, 20], sizes = [4, 384], strides = [1, 1]} : vector<4x512xbf16> to vector<4x384xbf16>
      %c60 = arith.constant 60 : index
      %c0_14 = arith.constant 0 : index
      %20 = vector.load %arg5[%c60, %c0_14] : memref<108x384xbf16, #tpu.memory_space<vmem>>, vector<4x384xbf16>
      tpu.vector_store %arg5[%c60, %c0_14], %19 {strides = array<i32>} : memref<108x384xbf16, #tpu.memory_space<vmem>>, vector<4x384xbf16>,
      %21 = vector.extract_strided_slice %8 {offsets = [0, 36], sizes = [4, 384], strides = [1, 1]} : vector<4x512xbf16> to vector<4x384xbf16>
      %c72 = arith.constant 72 : index
      %c0_15 = arith.constant 0 : index
      %22 = vector.load %arg5[%c72, %c0_15] : memref<108x384xbf16, #tpu.memory_space<vmem>>, vector<4x384xbf16>
      tpu.vector_store %arg5[%c72, %c0_15], %21 {strides = array<i32>} : memref<108x384xbf16, #tpu.memory_space<vmem>>, vector<4x384xbf16>,
      %23 = vector.extract_strided_slice %8 {offsets = [0, 37], sizes = [4, 384], strides = [1, 1]} : vector<4x512xbf16> to vector<4x384xbf16>
      %c84 = arith.constant 84 : index
      %c0_16 = arith.constant 0 : index
      %24 = vector.load %arg5[%c84, %c0_16] : memref<108x384xbf16, #tpu.memory_space<vmem>>, vector<4x384xbf16>
      tpu.vector_store %arg5[%c84, %c0_16], %23 {strides = array<i32>} : memref<108x384xbf16, #tpu.memory_space<vmem>>, vector<4x384xbf16>,
      %25 = vector.extract_strided_slice %8 {offsets = [0, 38], sizes = [4, 384], strides = [1, 1]} : vector<4x512xbf16> to vector<4x384xbf16>
      %c96 = arith.constant 96 : index
      %c0_17 = arith.constant 0 : index
      %26 = vector.load %arg5[%c96, %c0_17] : memref<108x384xbf16, #tpu.memory_space<vmem>>, vector<4x384xbf16>
      tpu.vector_store %arg5[%c96, %c0_17], %25 {strides = array<i32>} : memref<108x384xbf16, #tpu.memory_space<vmem>>, vector<4x384xbf16>,
      %c1_i32_18 = arith.constant 1 : i32
      %27 = arith.addi %4, %c1_i32_18 : i32
      %c0_19 = arith.constant 0 : index
      %28 = arith.index_cast %27 : i32 to index
      %c0_20 = arith.constant 0 : index
      %c0_21 = arith.constant 0 : index
      %29 = vector.load %arg2[%c0_19, %28, %c0_20, %c0_21] : memref<1x10x4x512xbf16, #tpu.memory_space<vmem>>, vector<1x1x4x512xbf16>
      %30 = vector.shape_cast %29 : vector<1x1x4x512xbf16> to vector<4x512xbf16>
      %31 = vector.extract_strided_slice %30 {offsets = [0, 0], sizes = [4, 384], strides = [1, 1]} : vector<4x512xbf16> to vector<4x384xbf16>
      %c4 = arith.constant 4 : index
      %c0_22 = arith.constant 0 : index
      %32 = vector.load %arg5[%c4, %c0_22] : memref<108x384xbf16, #tpu.memory_space<vmem>>, vector<4x384xbf16>
      tpu.vector_store %arg5[%c4, %c0_22], %31 {strides = array<i32>} : memref<108x384xbf16, #tpu.memory_space<vmem>>, vector<4x384xbf16>,
      %33 = vector.extract_strided_slice %30 {offsets = [0, 1], sizes = [4, 384], strides = [1, 1]} : vector<4x512xbf16> to vector<4x384xbf16>
      %c16 = arith.constant 16 : index
      %c0_23 = arith.constant 0 : index
      %34 = vector.load %arg5[%c16, %c0_23] : memref<108x384xbf16, #tpu.memory_space<vmem>>, vector<4x384xbf16>
      tpu.vector_store %arg5[%c16, %c0_23], %33 {strides = array<i32>} : memref<108x384xbf16, #tpu.memory_space<vmem>>, vector<4x384xbf16>,
      %35 = vector.extract_strided_slice %30 {offsets = [0, 2], sizes = [4, 384], strides = [1, 1]} : vector<4x512xbf16> to vector<4x384xbf16>
      %c28 = arith.constant 28 : index
      %c0_24 = arith.constant 0 : index
      %36 = vector.load %arg5[%c28, %c0_24] : memref<108x384xbf16, #tpu.memory_space<vmem>>, vector<4x384xbf16>
      tpu.vector_store %arg5[%c28, %c0_24], %35 {strides = array<i32>} : memref<108x384xbf16, #tpu.memory_space<vmem>>, vector<4x384xbf16>,
      %37 = vector.extract_strided_slice %30 {offsets = [0, 18], sizes = [4, 384], strides = [1, 1]} : vector<4x512xbf16> to vector<4x384xbf16>
      %c40 = arith.constant 40 : index
      %c0_25 = arith.constant 0 : index
      %38 = vector.load %arg5[%c40, %c0_25] : memref<108x384xbf16, #tpu.memory_space<vmem>>, vector<4x384xbf16>
      tpu.vector_store %arg5[%c40, %c0_25], %37 {strides = array<i32>} : memref<108x384xbf16, #tpu.memory_space<vmem>>, vector<4x384xbf16>,
      %39 = vector.extract_strided_slice %30 {offsets = [0, 19], sizes = [4, 384], strides = [1, 1]} : vector<4x512xbf16> to vector<4x384xbf16>
      %c52 = arith.constant 52 : index
      %c0_26 = arith.constant 0 : index
      %40 = vector.load %arg5[%c52, %c0_26] : memref<108x384xbf16, #tpu.memory_space<vmem>>, vector<4x384xbf16>
      tpu.vector_store %arg5[%c52, %c0_26], %39 {strides = array<i32>} : memref<108x384xbf16, #tpu.memory_space<vmem>>, vector<4x384xbf16>,
      %41 = vector.extract_strided_slice %30 {offsets = [0, 20], sizes = [4, 384], strides = [1, 1]} : vector<4x512xbf16> to vector<4x384xbf16>
      %c64 = arith.constant 64 : index
      %c0_27 = arith.constant 0 : index
      %42 = vector.load %arg5[%c64, %c0_27] : memref<108x384xbf16, #tpu.memory_space<vmem>>, vector<4x384xbf16>
      tpu.vector_store %arg5[%c64, %c0_27], %41 {strides = array<i32>} : memref<108x384xbf16, #tpu.memory_space<vmem>>, vector<4x384xbf16>,
      %43 = vector.extract_strided_slice %30 {offsets = [0, 36], sizes = [4, 384], strides = [1, 1]} : vector<4x512xbf16> to vector<4x384xbf16>
      %c76 = arith.constant 76 : index
      %c0_28 = arith.constant 0 : index
      %44 = vector.load %arg5[%c76, %c0_28] : memref<108x384xbf16, #tpu.memory_space<vmem>>, vector<4x384xbf16>
      tpu.vector_store %arg5[%c76, %c0_28], %43 {strides = array<i32>} : memref<108x384xbf16, #tpu.memory_space<vmem>>, vector<4x384xbf16>,
      %45 = vector.extract_strided_slice %30 {offsets = [0, 37], sizes = [4, 384], strides = [1, 1]} : vector<4x512xbf16> to vector<4x384xbf16>
      %c88 = arith.constant 88 : index
      %c0_29 = arith.constant 0 : index
      %46 = vector.load %arg5[%c88, %c0_29] : memref<108x384xbf16, #tpu.memory_space<vmem>>, vector<4x384xbf16>
      tpu.vector_store %arg5[%c88, %c0_29], %45 {strides = array<i32>} : memref<108x384xbf16, #tpu.memory_space<vmem>>, vector<4x384xbf16>,
      %47 = vector.extract_strided_slice %30 {offsets = [0, 38], sizes = [4, 384], strides = [1, 1]} : vector<4x512xbf16> to vector<4x384xbf16>
      %c100 = arith.constant 100 : index
      %c0_30 = arith.constant 0 : index
      %48 = vector.load %arg5[%c100, %c0_30] : memref<108x384xbf16, #tpu.memory_space<vmem>>, vector<4x384xbf16>
      tpu.vector_store %arg5[%c100, %c0_30], %47 {strides = array<i32>} : memref<108x384xbf16, #tpu.memory_space<vmem>>, vector<4x384xbf16>,
      %c2_i32 = arith.constant 2 : i32
      %49 = arith.addi %4, %c2_i32 : i32
      %c0_31 = arith.constant 0 : index
      %50 = arith.index_cast %49 : i32 to index
      %c0_32 = arith.constant 0 : index
      %c0_33 = arith.constant 0 : index
      %51 = vector.load %arg2[%c0_31, %50, %c0_32, %c0_33] : memref<1x10x4x512xbf16, #tpu.memory_space<vmem>>, vector<1x1x4x512xbf16>
      %52 = vector.shape_cast %51 : vector<1x1x4x512xbf16> to vector<4x512xbf16>
      %53 = vector.extract_strided_slice %52 {offsets = [0, 0], sizes = [4, 384], strides = [1, 1]} : vector<4x512xbf16> to vector<4x384xbf16>
      %c8 = arith.constant 8 : index
      %c0_34 = arith.constant 0 : index
      %54 = vector.load %arg5[%c8, %c0_34] : memref<108x384xbf16, #tpu.memory_space<vmem>>, vector<4x384xbf16>
      tpu.vector_store %arg5[%c8, %c0_34], %53 {strides = array<i32>} : memref<108x384xbf16, #tpu.memory_space<vmem>>, vector<4x384xbf16>,
      %55 = vector.extract_strided_slice %52 {offsets = [0, 1], sizes = [4, 384], strides = [1, 1]} : vector<4x512xbf16> to vector<4x384xbf16>
      %c20 = arith.constant 20 : index
      %c0_35 = arith.constant 0 : index
      %56 = vector.load %arg5[%c20, %c0_35] : memref<108x384xbf16, #tpu.memory_space<vmem>>, vector<4x384xbf16>
      tpu.vector_store %arg5[%c20, %c0_35], %55 {strides = array<i32>} : memref<108x384xbf16, #tpu.memory_space<vmem>>, vector<4x384xbf16>,
      %57 = vector.extract_strided_slice %52 {offsets = [0, 2], sizes = [4, 384], strides = [1, 1]} : vector<4x512xbf16> to vector<4x384xbf16>
      %c32 = arith.constant 32 : index
      %c0_36 = arith.constant 0 : index
      %58 = vector.load %arg5[%c32, %c0_36] : memref<108x384xbf16, #tpu.memory_space<vmem>>, vector<4x384xbf16>
      tpu.vector_store %arg5[%c32, %c0_36], %57 {strides = array<i32>} : memref<108x384xbf16, #tpu.memory_space<vmem>>, vector<4x384xbf16>,
      %59 = vector.extract_strided_slice %52 {offsets = [0, 18], sizes = [4, 384], strides = [1, 1]} : vector<4x512xbf16> to vector<4x384xbf16>
      %c44 = arith.constant 44 : index
      %c0_37 = arith.constant 0 : index
      %60 = vector.load %arg5[%c44, %c0_37] : memref<108x384xbf16, #tpu.memory_space<vmem>>, vector<4x384xbf16>
      tpu.vector_store %arg5[%c44, %c0_37], %59 {strides = array<i32>} : memref<108x384xbf16, #tpu.memory_space<vmem>>, vector<4x384xbf16>,
      %61 = vector.extract_strided_slice %52 {offsets = [0, 19], sizes = [4, 384], strides = [1, 1]} : vector<4x512xbf16> to vector<4x384xbf16>
      %c56 = arith.constant 56 : index
      %c0_38 = arith.constant 0 : index
      %62 = vector.load %arg5[%c56, %c0_38] : memref<108x384xbf16, #tpu.memory_space<vmem>>, vector<4x384xbf16>
      tpu.vector_store %arg5[%c56, %c0_38], %61 {strides = array<i32>} : memref<108x384xbf16, #tpu.memory_space<vmem>>, vector<4x384xbf16>,
      %63 = vector.extract_strided_slice %52 {offsets = [0, 20], sizes = [4, 384], strides = [1, 1]} : vector<4x512xbf16> to vector<4x384xbf16>
      %c68 = arith.constant 68 : index
      %c0_39 = arith.constant 0 : index
      %64 = vector.load %arg5[%c68, %c0_39] : memref<108x384xbf16, #tpu.memory_space<vmem>>, vector<4x384xbf16>
      tpu.vector_store %arg5[%c68, %c0_39], %63 {strides = array<i32>} : memref<108x384xbf16, #tpu.memory_space<vmem>>, vector<4x384xbf16>,
      %65 = vector.extract_strided_slice %52 {offsets = [0, 36], sizes = [4, 384], strides = [1, 1]} : vector<4x512xbf16> to vector<4x384xbf16>
      %c80 = arith.constant 80 : index
      %c0_40 = arith.constant 0 : index
      %66 = vector.load %arg5[%c80, %c0_40] : memref<108x384xbf16, #tpu.memory_space<vmem>>, vector<4x384xbf16>
      tpu.vector_store %arg5[%c80, %c0_40], %65 {strides = array<i32>} : memref<108x384xbf16, #tpu.memory_space<vmem>>, vector<4x384xbf16>,
      %67 = vector.extract_strided_slice %52 {offsets = [0, 37], sizes = [4, 384], strides = [1, 1]} : vector<4x512xbf16> to vector<4x384xbf16>
      %c92 = arith.constant 92 : index
      %c0_41 = arith.constant 0 : index
      %68 = vector.load %arg5[%c92, %c0_41] : memref<108x384xbf16, #tpu.memory_space<vmem>>, vector<4x384xbf16>
      tpu.vector_store %arg5[%c92, %c0_41], %67 {strides = array<i32>} : memref<108x384xbf16, #tpu.memory_space<vmem>>, vector<4x384xbf16>,
      %69 = vector.extract_strided_slice %52 {offsets = [0, 38], sizes = [4, 384], strides = [1, 1]} : vector<4x512xbf16> to vector<4x384xbf16>
      %c104 = arith.constant 104 : index
      %c0_42 = arith.constant 0 : index
      %70 = vector.load %arg5[%c104, %c0_42] : memref<108x384xbf16, #tpu.memory_space<vmem>>, vector<4x384xbf16>
      tpu.vector_store %arg5[%c104, %c0_42], %69 {strides = array<i32>} : memref<108x384xbf16, #tpu.memory_space<vmem>>, vector<4x384xbf16>,
      %c0_43 = arith.constant 0 : index
      %c0_44 = arith.constant 0 : index
      %71 = vector.load %arg5[%c0_43, %c0_44] : memref<108x384xbf16, #tpu.memory_space<vmem>>, vector<108x384xbf16>
      %cst = arith.constant dense<0.000000e+00> : vector<8x384xf32>
      %72 = tpu.matmul %0, %71, %cst {dimension_numbers = #tpu.dot_dimension_numbers<[1], [0], [0], [1], [0, 0, 1, 1], [], []>} : vector<8x108xbf16>, vector<108x384xbf16>, vector<8x384xf32> -> vector<8x384xf32>
      %c0_45 = arith.constant 0 : index
      %73 = arith.index_cast %arg6 : i32 to index
      %c0_46 = arith.constant 0 : index
      %c0_47 = arith.constant 0 : index
      %74 = vector.load %arg4[%c0_45, %73, %c0_46, %c0_47] : memref<1x8x8x384xf32, #tpu.memory_space<vmem>>, vector<1x1x8x384xf32>
      %75 = vector.shape_cast %74 : vector<1x1x8x384xf32> to vector<8x384xf32>
      %76 = vector.shape_cast %72 : vector<8x384xf32> to vector<1x1x8x384xf32>
      tpu.vector_store %arg4[%c0_45, %73, %c0_46, %c0_47], %76 {strides = array<i32>} : memref<1x8x8x384xf32, #tpu.memory_space<vmem>>, vector<1x1x8x384xf32>,
    }
    %c8_i32_1 = arith.constant 8 : i32
    return
  }
  func.func @transform_0(%arg0: i32, %arg1: i32) -> (i32, i32, i32, i32) {
    %c0_i32 = arith.constant 0 : i32
    %c0_i32_0 = arith.constant 0 : i32
    %c0_i32_1 = arith.constant 0 : i32
    %c0_i32_2 = arith.constant 0 : i32
    return %arg0, %c0_i32, %c0_i32_0, %c0_i32_1 : i32, i32, i32, i32
  }
  func.func @transform_1(%arg0: i32, %arg1: i32) -> (i32, i32) {
    %c0_i32 = arith.constant 0 : i32
    %c0_i32_0 = arith.constant 0 : i32
    %c0_i32_1 = arith.constant 0 : i32
    return %c0_i32, %c0_i32_0 : i32, i32
  }
  func.func @transform_2(%arg0: i32, %arg1: i32) -> (i32, i32, i32, i32) {
    %c0_i32 = arith.constant 0 : i32
    %c0_i32_0 = arith.constant 0 : i32
    %c0_i32_1 = arith.constant 0 : i32
    return %arg0, %arg1, %c0_i32, %c0_i32_0 : i32, i32, i32, i32
  }
}

</mosaic_0001>

<llo_original>
// kernel: spatio_temporal_conv.1
$region0: #{spatio_temporal_conv.1}
  #allocation0 [shape = 'u32[]', space=smem, size = 0x4, offset = 0x4, fixed_abs, tag = 'smem constant byte address 0x4 - core index']
  #allocation1 [shape = 'u32[144,128]{1,0:T(1,128)}', space=vmem, size = 0x12000, scoped, tag = 'internal scratch']
  #allocation2 [shape = 'bf16[108,384]{1,0:T(8,128)(2,1)}', space=vmem, size = 0x15000, scoped, tag = 'scratch operand']
  %s0 = inlined_call_operand.vmem [shape: bf16[2,10,4,512], index: 0, kind: input, shape index: {}]
  %s1 = inlined_call_operand.vmem [shape: bf16[8,108], index: 1, kind: input, shape index: {}]
  %s2 = inlined_call_operand.vmem [shape: f32[2,8,8,384], index: 2, kind: output, shape index: {}]
  %s3 = sld [smem:[#allocation0]]
  $region48: #{spatio_temporal_conv.1} parent=0
    _
  %s5 = ssub.s32 1, %s3
  %s6 = scalar_select 0, %s5, %s3
  loop: start=0, step=1, limit=4
  $region2: #{spatio_temporal_conv.1} parent=0 // loop_pre_header
    _
  $region3: #{spatio_temporal_conv.1} parent=0 // loop_header
    %s8 = sphi 0, %s12
    %p9 = scmp.ge.s32.totalorder %s8, 4
    %s15 = sphi 0, %s27
    %s16 = sphi 0, %s23
    %s17 = sphi 0, %s15
    %s18 = sphi 0, %s16
    %s19 = sphi 0, %s17
    %s20 = sphi 0, %s18
    %s30 = sphi 0, %s32
    %s33 = sphi 0, %s30
    %s34 = sphi 0, %s33
    %s50 = sphi 0, %s34
    %s54 = sphi 0, %s54
    %s56 = sphi 0, %s54
    %s57 = sphi 0, %s56
    %s71 = sphi 0, %s57
    %s79 = sphi 0, %s81
    %s82 = sphi 0, %s79
    %s83 = sphi 0, %s82
    %s99 = sphi 0, %s83
  $region4: #{spatio_temporal_conv.1} parent=0 // loop_header_branch
    %11 = sbr.rel (%p9) target = $region8
  $region5: #{spatio_temporal_conv.1} parent=0 // loop_body
    %s13 = ssub.s32 %s8, 1
    %s14 = ssub.s32 %s8, 2
    %s21 = sadd.s32 1, %s16
    %p22 = scmp.ge.s32.totalorder %s21, 1
    %s23 = scalar_select %p22, 0, %s21
    %s24 = sadd.s32 1, %s15
    %s25 = scalar_select %p22, %s24, %s15
    %p26 = scmp.ge.s32.totalorder %s25, 2
    %s27 = scalar_select %p26, 0, %s25
    %s28 = ssub.s32 %s15, %s27
    %p29 = scmp.eq.s32.totalorder %s28, 0
    %s31 = sadd.s32 %s30, 1
    %s32 = scalar_select %p29, %s30, %s31
    %p35 = pneg %p29
    %p36 = scmp.eq.s32.totalorder %s8, 1
    %p37 = por %p35, %p36
    %p38 = scmp.ne.s32.totalorder %s30, %s33
    %p39 = scmp.eq.s32.totalorder %s8, 0
    %p40 = por %p38, %p39
    %p41 = scmp.ne.s32.totalorder %s30, %s33
    %p42 = scmp.eq.s32.totalorder %s13, 1
    %p43 = por %p41, %p42
    %p44 = scmp.ne.s32.totalorder %s33, %s34
    %p45 = scmp.eq.s32.totalorder %s13, 0
    %p46 = por %p44, %p45
    %p47 = scmp.ne.s32.totalorder %s33, %s34
    %p48 = scmp.eq.s32.totalorder %s14, 1
    %p49 = por %p47, %p48
    %p51 = scmp.ne.s32.totalorder %s34, %s50
    %p52 = scmp.eq.s32.totalorder %s14, 0
    %p53 = por %p51, %p52
    %s55 = sadd.s32 %s54, 1
    %p58 = scmp.eq.s32.totalorder %s8, 1
    %p59 = scmp.ne.s32.totalorder %s54, %s56
    %p60 = scmp.eq.s32.totalorder %s8, 0
    %p61 = por %p59, %p60
    %p62 = scmp.ne.s32.totalorder %s54, %s56
    %p63 = scmp.eq.s32.totalorder %s13, 1
    %p64 = por %p62, %p63
    %p65 = scmp.ne.s32.totalorder %s56, %s57
    %p66 = scmp.eq.s32.totalorder %s13, 0
    %p67 = por %p65, %p66
    %p68 = scmp.ne.s32.totalorder %s56, %s57
    %p69 = scmp.eq.s32.totalorder %s14, 1
    %p70 = por %p68, %p69
    %p72 = scmp.ne.s32.totalorder %s57, %s71
    %p73 = scmp.eq.s32.totalorder %s14, 0
    %p74 = por %p72, %p73
    %s75 = ssub.s32 %s15, %s27
    %s76 = ssub.s32 %s16, %s23
    %s77 = sor.u32 %s75, %s76
    %p78 = scmp.eq.s32.totalorder %s77, 0
    %s80 = sadd.s32 %s79, 1
    %s81 = scalar_select %p78, %s79, %s80
    %p84 = pneg %p78
    %p85 = scmp.eq.s32.totalorder %s8, 1
    %p86 = por %p84, %p85
    %p87 = scmp.ne.s32.totalorder %s79, %s82
    %p88 = scmp.eq.s32.totalorder %s8, 0
    %p89 = por %p87, %p88
    %p90 = scmp.ne.s32.totalorder %s79, %s82
    %p91 = scmp.eq.s32.totalorder %s13, 1
    %p92 = por %p90, %p91
    %p93 = scmp.ne.s32.totalorder %s82, %s83
    %p94 = scmp.eq.s32.totalorder %s13, 0
    %p95 = por %p93, %p94
    %p96 = scmp.ne.s32.totalorder %s82, %s83
    %p97 = scmp.eq.s32.totalorder %s14, 1
    %p98 = por %p96, %p97
    %p100 = scmp.ne.s32.totalorder %s83, %s99
    %p101 = scmp.eq.s32.totalorder %s14, 0
    %p102 = por %p100, %p101
    %p103 = scmp.le.s32.totalorder 1, %s8
    %p104 = scmp.lt.s32.totalorder %s8, 3
    %p105 = pnand %p103, %p104
    %p106 = pneg %p105
    // Predicated region
    $region9: #{spatio_temporal_conv.1} parent=5 // pred_check
      _
    $region10: #{spatio_temporal_conv.1} parent=5 // pred_check_branch
      %108 = sbr.rel (%p105) target = $region12
    $region11: #{spatio_temporal_conv.1} parent=5 // pred_region
      %s109 = ssub.s32 %s8, 1
      // Predicated region
      $region13: #{spatio_temporal_conv.1} parent=11 // pred_check
        %p110 = pneg %p67
      $region14: #{spatio_temporal_conv.1} parent=11 // pred_check_branch
        %112 = sbr.rel (%p110) target = $region16
      $region15: #{spatio_temporal_conv.1} parent=11 // pred_region
        _
      $region16: #{spatio_temporal_conv.1} parent=11 // pred_fallthru
        _
    $region12: #{spatio_temporal_conv.1} parent=5 // pred_fallthru
      _
    %p113 = scmp.lt.s32.totalorder %s8, 2
    // Predicated region
    $region17: #{spatio_temporal_conv.1} parent=5 // pred_check
      %p114 = pneg %p113
    $region18: #{spatio_temporal_conv.1} parent=5 // pred_check_branch
      %116 = sbr.rel (%p114) target = $region20
    $region19: #{spatio_temporal_conv.1} parent=5 // pred_region
      // Predicated region
      $region21: #{spatio_temporal_conv.1} parent=19 // pred_check
        %p117 = pneg %p40
      $region22: #{spatio_temporal_conv.1} parent=19 // pred_check_branch
        %119 = sbr.rel (%p117) target = $region24
      $region23: #{spatio_temporal_conv.1} parent=19 // pred_region
        %p120 = scmp.lt.s32.totalorder %s15, 1
        %s121 = scalar_select %p120, %s15, 1
        %s122 = smul.addr %s121, 40
        %s123 = smul.addr %s122, 2
        %s124 = scalar_lea.vmem %s0, %s123
      $region24: #{spatio_temporal_conv.1} parent=19 // pred_fallthru
        _
    $region20: #{spatio_temporal_conv.1} parent=5 // pred_fallthru
      _
    %p125 = scmp.le.s32.totalorder 1, %s8
    %p126 = scmp.lt.s32.totalorder %s8, 3
    %p127 = pnand %p125, %p126
    %p128 = pneg %p127
    // Predicated region
    $region25: #{spatio_temporal_conv.1} parent=5 // pred_check
      _
    $region26: #{spatio_temporal_conv.1} parent=5 // pred_check_branch
      %130 = sbr.rel (%p127) target = $region28
    $region27: #{spatio_temporal_conv.1} parent=5 // pred_region
      %s131 = ssub.s32 %s8, 1
      %p132 = scmp.lt.s32.totalorder %s17, 1
      %s133 = scalar_select %p132, %s17, 1
      %s134 = smul.addr %s133, 40
      %s135 = smul.addr %s134, 2
      %s136 = scalar_lea.vmem %s0, %s135
      %p137 = pneg %p46
      %p138 = pneg %p43
      %p139 = pneg %p67
      %p140 = pneg %p64
      %p141 = pneg %p95
      %p142 = pneg %p92
      %s143 = smul.u32 8, %s18
      %p144 = scmp.lt.s32.totalorder %s17, 1
      %s145 = scalar_select %p144, %s17, 1
      %p146 = scmp.lt.s32.totalorder %s143, 7
      %s147 = scalar_select %p146, %s143, 7
      %s148 = smul.addr %s147, 3
      %s149 = smul.addr %s145, 24
      %s150 = sadd.s32 %s148, %s149
      %s151 = smul.addr %s150, 8
      %s152 = scalar_lea.vmem %s2, %s151
      %p153 = scmp.lt.s32.totalorder %s17, 1
      %s154 = scalar_select %p153, %s17, 1
      %s155 = smul.addr %s154, 40
      %s156 = smul.addr %s155, 2
      %s157 = scalar_lea.vmem %s0, %s156
      %s158 = smul.u32 8, %s18
      %p159 = scmp.lt.s32.totalorder %s17, 1
      %s160 = scalar_select %p159, %s17, 1
      %p161 = scmp.lt.s32.totalorder %s158, 7
      %s162 = scalar_select %p161, %s158, 7
      %s163 = smul.addr %s162, 3
      %s164 = smul.addr %s160, 24
      %s165 = sadd.s32 %s163, %s164
      %s166 = smul.addr %s165, 8
      %s167 = scalar_lea.vmem %s2, %s166
      %s168 = smul.u32 8, %s18
      %v170 = vld [vmem:[%s1] sm:$0xf]
      loop: start=0, step=1, limit=8
      $region29: #{spatio_temporal_conv.1} parent=27 // loop_pre_header
        _
      $region30: #{spatio_temporal_conv.1} parent=27 // loop_header
        %s172 = sphi 0, %s176
        %p173 = scmp.ge.s32.totalorder %s172, 8
      $region31: #{spatio_temporal_conv.1} parent=27 // loop_header_branch
        %175 = sbr.rel (%p173) target = $region35
      $region32: #{spatio_temporal_conv.1} parent=27 // loop_body
        %s177 = smul.u32 %s18, 8
        %s178 = sadd.s32 %s177, %s172
        %s179 = smul.u32 %s178, 4
        %s180 = smul.addr %s179, 2
        %s181 = scalar_lea.vmem %s157, %s180
        %v182 = vld [vmem:[%s181] sm:$0xff]
        %v184 = vcombine.high %v182, %v182
        %v186 = vunpack.c.l.s4 1983009808
        %v187 = vunpack.c.0.s8 %v186
        %v188 = vlaneseq
        %v189 = vshrl.u32 %v188, 7
        %v190 = vsub.s32 %v187, %v189
        %v191 = vrot.slane %v182, %v190
        %v193 = vunpack.c.l.s4 1983009808
        %v194 = vunpack.c.0.s8 %v193
        %v195 = vlaneseq
        %v196 = vshrl.u32 %v195, 7
        %v197 = vsub.s32 %v194, %v196
        %v198 = vrot.slane %v184, %v197
        %201 = vst [vmem:[#allocation2] sm:$0x33] %v191
        %202 = vst [vmem:[#allocation2 + $0x8] sm:$0x3] %v198
        %v203 = vcombine.low %v182, %v182
        %v205 = vunpack.c.l.s4 1983009808
        %v206 = vunpack.c.0.s8 %v205
        %v207 = vlaneseq
        %v208 = vshrl.u32 %v207, 7
        %v209 = vsub.s32 %v206, %v208
        %v210 = vrot.slane %v203, %v209
        %211 = vrot.lane.b32.xlu0 %v210, 127
        %v212 = vpop.permute.xlu0 %211
        %213 = vrot.lane.b32.xlu0 %v191, 127
        %v214 = vpop.permute.xlu0 %213
        %v215 = vrot.slane %v212, 4
        %v216 = vrot.slane %v214, 4
        %vm217 = vcmask 1043456
        %v218 = vsel %vm217, %v215, %v216
        %vm219 = vcmask 1039360
        %v220 = vsel %vm219, %v212, %v218
        %v221 = vsel %vm219, %v214, %v216
        %224 = vst [vmem:[#allocation2 + $0xc] sm:$0xcc] %v220
        %225 = vst [vmem:[#allocation2 + $0x14] sm:$0xc] %v221
        %226 = vrot.lane.b32.xlu0 %v191, 126
        %v227 = vpop.permute.xlu0 %226
        %228 = vrot.lane.b32.xlu0 %v198, 126
        %v229 = vpop.permute.xlu0 %228
        %v230 = vrot.slane %v227, 4
        %v231 = vrot.slane %v229, 4
        %v232 = vsel %vm217, %v230, %v231
        %vm233 = vcmask 1031168
        %v234 = vsel %vm233, %v227, %v232
        %v235 = vsel %vm233, %v229, %v231
        %238 = vst [vmem:[#allocation2 + $0x24] sm:$0x33] %v234
        %239 = vst [vmem:[#allocation2 + $0x2c] sm:$0x3] %v235
        %240 = vrot.lane.b32.xlu0 %v210, 110
        %v241 = vpop.permute.xlu0 %240
        %242 = vrot.lane.b32.xlu0 %v191, 110
        %v243 = vpop.permute.xlu0 %242
        %v244 = vrot.slane %v241, 4
        %v245 = vrot.slane %v243, 4
        %v246 = vsel %vm217, %v244, %v245
        %vm247 = vcmask 900096
        %v248 = vsel %vm247, %v241, %v246
        %v249 = vsel %vm247, %v243, %v245
        %252 = vst [vmem:[#allocation2 + $0x30] sm:$0xcc] %v248
        %253 = vst [vmem:[#allocation2 + $0x38] sm:$0xc] %v249
        %254 = vrot.lane.b32.xlu0 %v191, 109
        %v255 = vpop.permute.xlu0 %254
        %256 = vrot.lane.b32.xlu0 %v198, 109
        %v257 = vpop.permute.xlu0 %256
        %v258 = vrot.slane %v255, 4
        %v259 = vrot.slane %v257, 4
        %v260 = vsel %vm217, %v258, %v259
        %vm261 = vcmask 891904
        %v262 = vsel %vm261, %v255, %v260
        %v263 = vsel %vm261, %v257, %v259
        %266 = vst [vmem:[#allocation2 + $0x48] sm:$0x33] %v262
        %267 = vst [vmem:[#allocation2 + $0x50] sm:$0x3] %v263
        %268 = vrot.lane.b32.xlu0 %v210, 108
        %v269 = vpop.permute.xlu0 %268
        %270 = vrot.lane.b32.xlu0 %v191, 108
        %v271 = vpop.permute.xlu0 %270
        %v272 = vrot.slane %v269, 4
        %v273 = vrot.slane %v271, 4
        %v274 = vsel %vm217, %v272, %v273
        %vm275 = vcmask 883712
        %v276 = vsel %vm275, %v269, %v274
        %v277 = vsel %vm275, %v271, %v273
        %280 = vst [vmem:[#allocation2 + $0x54] sm:$0xcc] %v276
        %281 = vst [vmem:[#allocation2 + $0x5c] sm:$0xc] %v277
        %282 = vrot.lane.b32.xlu0 %v191, 92
        %v283 = vpop.permute.xlu0 %282
        %284 = vrot.lane.b32.xlu0 %v198, 92
        %v285 = vpop.permute.xlu0 %284
        %v286 = vrot.slane %v283, 4
        %v287 = vrot.slane %v285, 4
        %v288 = vsel %vm217, %v286, %v287
        %vm289 = vcmask 752640
        %v290 = vsel %vm289, %v283, %v288
        %v291 = vsel %vm289, %v285, %v287
        %294 = vst [vmem:[#allocation2 + $0x6c] sm:$0x33] %v290
        %295 = vst [vmem:[#allocation2 + $0x74] sm:$0x3] %v291
        %296 = vrot.lane.b32.xlu0 %v210, 91
        %v297 = vpop.permute.xlu0 %296
        %298 = vrot.lane.b32.xlu0 %v191, 91
        %v299 = vpop.permute.xlu0 %298
        %v300 = vrot.slane %v297, 4
        %v301 = vrot.slane %v299, 4
        %v302 = vsel %vm217, %v300, %v301
        %vm303 = vcmask 744448
        %v304 = vsel %vm303, %v297, %v302
        %v305 = vsel %vm303, %v299, %v301
        %308 = vst [vmem:[#allocation2 + $0x78] sm:$0xcc] %v304
        %309 = vst [vmem:[#allocation2 + $0x80] sm:$0xc] %v305
        %310 = vrot.lane.b32.xlu0 %v191, 90
        %v311 = vpop.permute.xlu0 %310
        %312 = vrot.lane.b32.xlu0 %v198, 90
        %v313 = vpop.permute.xlu0 %312
        %v314 = vrot.slane %v311, 4
        %v315 = vrot.slane %v313, 4
        %v316 = vsel %vm217, %v314, %v315
        %vm317 = vcmask 736256
        %v318 = vsel %vm317, %v311, %v316
        %v319 = vsel %vm317, %v313, %v315
        %322 = vst [vmem:[#allocation2 + $0x90] sm:$0x33] %v318
        %323 = vst [vmem:[#allocation2 + $0x98] sm:$0x3] %v319
        %s324 = sadd.s32 %s178, 1
        %s325 = smul.u32 %s324, 4
        %s326 = smul.addr %s325, 2
        %s327 = scalar_lea.vmem %s157, %s326
        %v328 = vld [vmem:[%s327] sm:$0xff]
        %v330 = vcombine.low %v328, %v328
        %v332 = vunpack.c.l.s4 1983009808
        %v333 = vunpack.c.0.s8 %v332
        %v334 = vlaneseq
        %v335 = vshrl.u32 %v334, 7
        %v336 = vsub.s32 %v333, %v335
        %v337 = vrot.slane %v330, %v336
        %v339 = vunpack.c.l.s4 1983009808
        %v340 = vunpack.c.0.s8 %v339
        %v341 = vlaneseq
        %v342 = vshrl.u32 %v341, 7
        %v343 = vsub.s32 %v340, %v342
        %v344 = vrot.slane %v328, %v343
        %347 = vst [vmem:[#allocation2] sm:$0xcc] %v337
        %348 = vst [vmem:[#allocation2 + $0x8] sm:$0xc] %v344
        %v349 = vcombine.high %v328, %v328
        %v351 = vunpack.c.l.s4 1983009808
        %v352 = vunpack.c.0.s8 %v351
        %v353 = vlaneseq
        %v354 = vshrl.u32 %v353, 7
        %v355 = vsub.s32 %v352, %v354
        %v356 = vrot.slane %v349, %v355
        %357 = vrot.lane.b32.xlu0 %v344, 127
        %v358 = vpop.permute.xlu0 %357
        %359 = vrot.lane.b32.xlu0 %v356, 127
        %v360 = vpop.permute.xlu0 %359
        %v361 = vrot.slane %v358, 4
        %v362 = vrot.slane %v360, 4
        %v363 = vsel %vm217, %v361, %v362
        %v364 = vsel %vm219, %v358, %v363
        %v365 = vsel %vm219, %v360, %v362
        %368 = vst [vmem:[#allocation2 + $0x18] sm:$0x33] %v364
        %369 = vst [vmem:[#allocation2 + $0x20] sm:$0x3] %v365
        %370 = vrot.lane.b32.xlu0 %v337, 126
        %v371 = vpop.permute.xlu0 %370
        %372 = vrot.lane.b32.xlu0 %v344, 126
        %v373 = vpop.permute.xlu0 %372
        %v374 = vrot.slane %v371, 4
        %v375 = vrot.slane %v373, 4
        %v376 = vsel %vm217, %v374, %v375
        %v377 = vsel %vm233, %v371, %v376
        %v378 = vsel %vm233, %v373, %v375
        %381 = vst [vmem:[#allocation2 + $0x24] sm:$0xcc] %v377
        %382 = vst [vmem:[#allocation2 + $0x2c] sm:$0xc] %v378
        %383 = vrot.lane.b32.xlu0 %v344, 110
        %v384 = vpop.permute.xlu0 %383
        %385 = vrot.lane.b32.xlu0 %v356, 110
        %v386 = vpop.permute.xlu0 %385
        %v387 = vrot.slane %v384, 4
        %v388 = vrot.slane %v386, 4
        %v389 = vsel %vm217, %v387, %v388
        %v390 = vsel %vm247, %v384, %v389
        %v391 = vsel %vm247, %v386, %v388
        %394 = vst [vmem:[#allocation2 + $0x3c] sm:$0x33] %v390
        %395 = vst [vmem:[#allocation2 + $0x44] sm:$0x3] %v391
        %396 = vrot.lane.b32.xlu0 %v337, 109
        %v397 = vpop.permute.xlu0 %396
        %398 = vrot.lane.b32.xlu0 %v344, 109
        %v399 = vpop.permute.xlu0 %398
        %v400 = vrot.slane %v397, 4
        %v401 = vrot.slane %v399, 4
        %v402 = vsel %vm217, %v400, %v401
        %v403 = vsel %vm261, %v397, %v402
        %v404 = vsel %vm261, %v399, %v401
        %407 = vst [vmem:[#allocation2 + $0x48] sm:$0xcc] %v403
        %408 = vst [vmem:[#allocation2 + $0x50] sm:$0xc] %v404
        %409 = vrot.lane.b32.xlu0 %v344, 108
        %v410 = vpop.permute.xlu0 %409
        %411 = vrot.lane.b32.xlu0 %v356, 108
        %v412 = vpop.permute.xlu0 %411
        %v413 = vrot.slane %v410, 4
        %v414 = vrot.slane %v412, 4
        %v415 = vsel %vm217, %v413, %v414
        %v416 = vsel %vm275, %v410, %v415
        %v417 = vsel %vm275, %v412, %v414
        %420 = vst [vmem:[#allocation2 + $0x60] sm:$0x33] %v416
        %421 = vst [vmem:[#allocation2 + $0x68] sm:$0x3] %v417
        %422 = vrot.lane.b32.xlu0 %v337, 92
        %v423 = vpop.permute.xlu0 %422
        %424 = vrot.lane.b32.xlu0 %v344, 92
        %v425 = vpop.permute.xlu0 %424
        %v426 = vrot.slane %v423, 4
        %v427 = vrot.slane %v425, 4
        %v428 = vsel %vm217, %v426, %v427
        %v429 = vsel %vm289, %v423, %v428
        %v430 = vsel %vm289, %v425, %v427
        %433 = vst [vmem:[#allocation2 + $0x6c] sm:$0xcc] %v429
        %434 = vst [vmem:[#allocation2 + $0x74] sm:$0xc] %v430
        %435 = vrot.lane.b32.xlu0 %v344, 91
        %v436 = vpop.permute.xlu0 %435
        %437 = vrot.lane.b32.xlu0 %v356, 91
        %v438 = vpop.permute.xlu0 %437
        %v439 = vrot.slane %v436, 4
        %v440 = vrot.slane %v438, 4
        %v441 = vsel %vm217, %v439, %v440
        %v442 = vsel %vm303, %v436, %v441
        %v443 = vsel %vm303, %v438, %v440
        %446 = vst [vmem:[#allocation2 + $0x84] sm:$0x33] %v442
        %447 = vst [vmem:[#allocation2 + $0x8c] sm:$0x3] %v443
        %448 = vrot.lane.b32.xlu0 %v337, 90
        %v449 = vpop.permute.xlu0 %448
        %450 = vrot.lane.b32.xlu0 %v344, 90
        %v451 = vpop.permute.xlu0 %450
        %v452 = vrot.slane %v449, 4
        %v453 = vrot.slane %v451, 4
        %v454 = vsel %vm217, %v452, %v453
        %v455 = vsel %vm317, %v449, %v454
        %v456 = vsel %vm317, %v451, %v453
        %459 = vst [vmem:[#allocation2 + $0x90] sm:$0xcc] %v455
        %460 = vst [vmem:[#allocation2 + $0x98] sm:$0xc] %v456
        %s461 = sadd.s32 %s178, 2
        %s462 = smul.u32 %s461, 4
        %s463 = smul.addr %s462, 2
        %s464 = scalar_lea.vmem %s157, %s463
        %v465 = vld [vmem:[%s464] sm:$0xff]
        %v467 = vcombine.high %v465, %v465
        %v469 = vunpack.c.l.s4 1983009808
        %v470 = vunpack.c.0.s8 %v469
        %v471 = vlaneseq
        %v472 = vshrl.u32 %v471, 7
        %v473 = vsub.s32 %v470, %v472
        %v474 = vrot.slane %v465, %v473
        %v476 = vunpack.c.l.s4 1983009808
        %v477 = vunpack.c.0.s8 %v476
        %v478 = vlaneseq
        %v479 = vshrl.u32 %v478, 7
        %v480 = vsub.s32 %v477, %v479
        %v481 = vrot.slane %v467, %v480
        %484 = vst [vmem:[#allocation2 + $0xc] sm:$0x33] %v474
        %485 = vst [vmem:[#allocation2 + $0x14] sm:$0x3] %v481
        %v486 = vcombine.low %v465, %v465
        %v488 = vunpack.c.l.s4 1983009808
        %v489 = vunpack.c.0.s8 %v488
        %v490 = vlaneseq
        %v491 = vshrl.u32 %v490, 7
        %v492 = vsub.s32 %v489, %v491
        %v493 = vrot.slane %v486, %v492
        %494 = vrot.lane.b32.xlu0 %v493, 127
        %v495 = vpop.permute.xlu0 %494
        %496 = vrot.lane.b32.xlu0 %v474, 127
        %v497 = vpop.permute.xlu0 %496
        %v498 = vrot.slane %v495, 4
        %v499 = vrot.slane %v497, 4
        %v500 = vsel %vm217, %v498, %v499
        %v501 = vsel %vm219, %v495, %v500
        %v502 = vsel %vm219, %v497, %v499
        %505 = vst [vmem:[#allocation2 + $0x18] sm:$0xcc] %v501
        %506 = vst [vmem:[#allocation2 + $0x20] sm:$0xc] %v502
        %507 = vrot.lane.b32.xlu0 %v474, 126
        %v508 = vpop.permute.xlu0 %507
        %509 = vrot.lane.b32.xlu0 %v481, 126
        %v510 = vpop.permute.xlu0 %509
        %v511 = vrot.slane %v508, 4
        %v512 = vrot.slane %v510, 4
        %v513 = vsel %vm217, %v511, %v512
        %v514 = vsel %vm233, %v508, %v513
        %v515 = vsel %vm233, %v510, %v512
        %518 = vst [vmem:[#allocation2 + $0x30] sm:$0x33] %v514
        %519 = vst [vmem:[#allocation2 + $0x38] sm:$0x3] %v515
        %520 = vrot.lane.b32.xlu0 %v493, 110
        %v521 = vpop.permute.xlu0 %520
        %522 = vrot.lane.b32.xlu0 %v474, 110
        %v523 = vpop.permute.xlu0 %522
        %v524 = vrot.slane %v521, 4
        %v525 = vrot.slane %v523, 4
        %v526 = vsel %vm217, %v524, %v525
        %v527 = vsel %vm247, %v521, %v526
        %v528 = vsel %vm247, %v523, %v525
        %531 = vst [vmem:[#allocation2 + $0x3c] sm:$0xcc] %v527
        %532 = vst [vmem:[#allocation2 + $0x44] sm:$0xc] %v528
        %533 = vrot.lane.b32.xlu0 %v474, 109
        %v534 = vpop.permute.xlu0 %533
        %535 = vrot.lane.b32.xlu0 %v481, 109
        %v536 = vpop.permute.xlu0 %535
        %v537 = vrot.slane %v534, 4
        %v538 = vrot.slane %v536, 4
        %v539 = vsel %vm217, %v537, %v538
        %v540 = vsel %vm261, %v534, %v539
        %v541 = vsel %vm261, %v536, %v538
        %544 = vst [vmem:[#allocation2 + $0x54] sm:$0x33] %v540
        %545 = vst [vmem:[#allocation2 + $0x5c] sm:$0x3] %v541
        %546 = vrot.lane.b32.xlu0 %v493, 108
        %v547 = vpop.permute.xlu0 %546
        %548 = vrot.lane.b32.xlu0 %v474, 108
        %v549 = vpop.permute.xlu0 %548
        %v550 = vrot.slane %v547, 4
        %v551 = vrot.slane %v549, 4
        %v552 = vsel %vm217, %v550, %v551
        %v553 = vsel %vm275, %v547, %v552
        %v554 = vsel %vm275, %v549, %v551
        %557 = vst [vmem:[#allocation2 + $0x60] sm:$0xcc] %v553
        %558 = vst [vmem:[#allocation2 + $0x68] sm:$0xc] %v554
        %559 = vrot.lane.b32.xlu0 %v474, 92
        %v560 = vpop.permute.xlu0 %559
        %561 = vrot.lane.b32.xlu0 %v481, 92
        %v562 = vpop.permute.xlu0 %561
        %v563 = vrot.slane %v560, 4
        %v564 = vrot.slane %v562, 4
        %v565 = vsel %vm217, %v563, %v564
        %v566 = vsel %vm289, %v560, %v565
        %v567 = vsel %vm289, %v562, %v564
        %570 = vst [vmem:[#allocation2 + $0x78] sm:$0x33] %v566
        %571 = vst [vmem:[#allocation2 + $0x80] sm:$0x3] %v567
        %572 = vrot.lane.b32.xlu0 %v493, 91
        %v573 = vpop.permute.xlu0 %572
        %574 = vrot.lane.b32.xlu0 %v474, 91
        %v575 = vpop.permute.xlu0 %574
        %v576 = vrot.slane %v573, 4
        %v577 = vrot.slane %v575, 4
        %v578 = vsel %vm217, %v576, %v577
        %v579 = vsel %vm303, %v573, %v578
        %v580 = vsel %vm303, %v575, %v577
        %583 = vst [vmem:[#allocation2 + $0x84] sm:$0xcc] %v579
        %584 = vst [vmem:[#allocation2 + $0x8c] sm:$0xc] %v580
        %585 = vrot.lane.b32.xlu0 %v474, 90
        %v586 = vpop.permute.xlu0 %585
        %587 = vrot.lane.b32.xlu0 %v481, 90
        %v588 = vpop.permute.xlu0 %587
        %v589 = vrot.slane %v586, 4
        %v590 = vrot.slane %v588, 4
        %v591 = vsel %vm217, %v589, %v590
        %v592 = vsel %vm317, %v586, %v591
        %v593 = vsel %vm317, %v588, %v590
        %596 = vst [vmem:[#allocation2 + $0x9c] sm:$0x33] %v592
        %597 = vst [vmem:[#allocation2 + $0xa4] sm:$0x3] %v593
        %v598 = vld [vmem:[#allocation2] sm:$0xff]
        %v599 = vld [vmem:[#allocation2 + $0x8] sm:$0xf]
        %v600 = vld [vmem:[#allocation2 + $0xc] sm:$0xff]
        %v601 = vld [vmem:[#allocation2 + $0x14] sm:$0xf]
        %v602 = vld [vmem:[#allocation2 + $0x18] sm:$0xff]
        %v603 = vld [vmem:[#allocation2 + $0x20] sm:$0xf]
        %v604 = vld [vmem:[#allocation2 + $0x24] sm:$0xff]
        %v605 = vld [vmem:[#allocation2 + $0x2c] sm:$0xf]
        %v606 = vld [vmem:[#allocation2 + $0x30] sm:$0xff]
        %v607 = vld [vmem:[#allocation2 + $0x38] sm:$0xf]
        %v608 = vld [vmem:[#allocation2 + $0x3c] sm:$0xff]
        %v609 = vld [vmem:[#allocation2 + $0x44] sm:$0xf]
        %v610 = vld [vmem:[#allocation2 + $0x48] sm:$0xff]
        %v611 = vld [vmem:[#allocation2 + $0x50] sm:$0xf]
        %v612 = vld [vmem:[#allocation2 + $0x54] sm:$0xff]
        %v613 = vld [vmem:[#allocation2 + $0x5c] sm:$0xf]
        %v614 = vld [vmem:[#allocation2 + $0x60] sm:$0xff]
        %v615 = vld [vmem:[#allocation2 + $0x68] sm:$0xf]
        %v616 = vld [vmem:[#allocation2 + $0x6c] sm:$0xff]
        %v617 = vld [vmem:[#allocation2 + $0x74] sm:$0xf]
        %v618 = vld [vmem:[#allocation2 + $0x78] sm:$0xff]
        %v619 = vld [vmem:[#allocation2 + $0x80] sm:$0xf]
        %v620 = vld [vmem:[#allocation2 + $0x84] sm:$0xff]
        %v621 = vld [vmem:[#allocation2 + $0x8c] sm:$0xf]
        %v622 = vld [vmem:[#allocation2 + $0x90] sm:$0xff]
        %v623 = vld [vmem:[#allocation2 + $0x98] sm:$0xf]
        %v624 = vld [vmem:[#allocation2 + $0x9c] sm:$0x33]
        %v625 = vld [vmem:[#allocation2 + $0xa4] sm:$0x3]
        %v654 = vunpack.c.l.b16 %v598
        %v655 = vunpack.c.h.b16 %v598
        %v656 = vunpack.c.l.b16 %v599
        %v657 = vunpack.c.l.b16 %v600
        %v658 = vunpack.c.h.b16 %v600
        %v659 = vunpack.c.l.b16 %v601
        %v660 = vunpack.c.l.b16 %v602
        %v661 = vunpack.c.h.b16 %v602
        %v662 = vunpack.c.l.b16 %v603
        %v663 = vunpack.c.l.b16 %v604
        %v664 = vunpack.c.h.b16 %v604
        %v665 = vunpack.c.l.b16 %v605
        %v666 = vunpack.c.l.b16 %v606
        %v667 = vunpack.c.h.b16 %v606
        %v668 = vunpack.c.l.b16 %v607
        %v669 = vunpack.c.l.b16 %v608
        %v670 = vunpack.c.h.b16 %v608
        %v671 = vunpack.c.l.b16 %v609
        %v672 = vunpack.c.l.b16 %v610
        %v673 = vunpack.c.h.b16 %v610
        %v674 = vunpack.c.l.b16 %v611
        %v675 = vunpack.c.l.b16 %v612
        %v676 = vunpack.c.h.b16 %v612
        %v677 = vunpack.c.l.b16 %v613
        %v678 = vunpack.c.l.b16 %v614
        %v679 = vunpack.c.h.b16 %v614
        %v680 = vunpack.c.l.b16 %v615
        %v681 = vunpack.c.l.b16 %v616
        %v682 = vunpack.c.h.b16 %v616
        %v683 = vunpack.c.l.b16 %v617
        %v684 = vunpack.c.l.b16 %v618
        %v685 = vunpack.c.h.b16 %v618
        %v686 = vunpack.c.l.b16 %v619
        %v687 = vunpack.c.l.b16 %v620
        %v688 = vunpack.c.h.b16 %v620
        %v689 = vunpack.c.l.b16 %v621
        %v690 = vunpack.c.l.b16 %v622
        %v691 = vunpack.c.h.b16 %v622
        %v692 = vunpack.c.l.b16 %v623
        %v693 = vunpack.c.l.b16 %v624
        %v694 = vunpack.c.h.b16 %v624
        %v695 = vunpack.c.l.b16 %v625
        %v696 = vpack.c.b16 %v657, %v654
        %v697 = vpack.c.b16 %v658, %v655
        %v698 = vpack.c.b16 %v659, %v656
        %v699 = vpack.c.b16 %v663, %v660
        %v700 = vpack.c.b16 %v664, %v661
        %v701 = vpack.c.b16 %v665, %v662
        %v702 = vpack.c.b16 %v669, %v666
        %v703 = vpack.c.b16 %v670, %v667
        %v704 = vpack.c.b16 %v671, %v668
        %v705 = vpack.c.b16 %v675, %v672
        %v706 = vpack.c.b16 %v676, %v673
        %v707 = vpack.c.b16 %v677, %v674
        %v708 = vpack.c.b16 %v681, %v678
        %v709 = vpack.c.b16 %v682, %v679
        %v710 = vpack.c.b16 %v683, %v680
        %v711 = vpack.c.b16 %v687, %v684
        %v712 = vpack.c.b16 %v688, %v685
        %v713 = vpack.c.b16 %v689, %v686
        %v714 = vpack.c.b16 %v693, %v690
        %v715 = vpack.c.b16 %v694, %v691
        %v716 = vpack.c.b16 %v695, %v692
        %vm735 = vcmask 883712
        %v737 = vsel %vm735, %v170, 0
        %vm739 = vcmask 1045504
        %v741 = vsel %vm739, %v714, 0
        %v744 = vsel %vm739, %v715, 0
        %v747 = vsel %vm739, %v716, 0
        %749 = vmatprep.subr.bf16.mxu0 %v697
        %750 = vmatpush1.bf16.msra.mxu0 %v696
        %751 = vmatprep.subr.bf16.mxu0 %v700
        %752 = vmatpush1.bf16.msra.mxu0 %v699
        %753 = vmatprep.subr.bf16.mxu0 %v703
        %754 = vmatpush1.bf16.msra.mxu0 %v702
        %755 = vmatprep.subr.bf16.mxu0 %v706
        %756 = vmatpush1.bf16.msra.mxu0 %v705
        %757 = vmatprep.subr.bf16.mxu0 %v709
        %758 = vmatpush1.bf16.msra.mxu0 %v708
        %759 = vmatprep.subr.bf16.mxu0 %v712
        %760 = vmatpush1.bf16.msra.mxu0 %v711
        %761 = vmatprep.subr.bf16.mxu0 %v744
        %762 = vmatpush1.bf16.msra.mxu0 %v741
        %763 = vmatprep.subr.bf16.mxu0 0
        %764 = vmatpush1.bf16.msra.mxu0 0
        %765 = vmatprep.subr.bf16.mxu0 0
        %766 = vmatpush1.bf16.msra.mxu0 0
        %767 = vmatprep.subr.bf16.mxu0 0
        %768 = vmatpush1.bf16.msra.mxu0 0
        %769 = vmatprep.subr.bf16.mxu0 0
        %770 = vmatpush1.bf16.msra.mxu0 0
        %771 = vmatprep.subr.bf16.mxu0 0
        %772 = vmatpush1.bf16.msra.mxu0 0
        %773 = vmatprep.subr.bf16.mxu0 0
        %774 = vmatpush1.bf16.msra.mxu0 0
        %775 = vmatprep.subr.bf16.mxu0 0
        %776 = vmatpush1.bf16.msra.mxu0 0
        %777 = vmatprep.subr.bf16.mxu0 0
        %778 = vmatpush1.bf16.msra.mxu0 0
        %779 = vmatprep.subr.bf16.mxu0 0
        %780 = vmatpush1.bf16.msra.mxu0 0
        %781 = vmatprep.mubr.bf16.mxu0 0
        %782 = vmatmul.mubr.bf16.gmra.mrb[0].mxu0 %v737
        %v783 = vpop.f32.mrb[0].mxu0
        %v784 = vadd.f32 0.0, %v783
        %v785 = vpop.f32.mrb[0].mxu0
        %v786 = vadd.f32 0.0, %v785
        %v787 = vpop.f32.mrb[0].mxu0
        %v788 = vpop.f32.mrb[0].mxu0
        %789 = vdwg.mxu0
        %790 = vmatprep.subr.bf16.mxu0 0
        %791 = vmatpush1.bf16.msra.mxu0 %v698
        %792 = vmatprep.subr.bf16.mxu0 0
        %793 = vmatpush1.bf16.msra.mxu0 %v701
        %794 = vmatprep.subr.bf16.mxu0 0
        %795 = vmatpush1.bf16.msra.mxu0 %v704
        %796 = vmatprep.subr.bf16.mxu0 0
        %797 = vmatpush1.bf16.msra.mxu0 %v707
        %798 = vmatprep.subr.bf16.mxu0 0
        %799 = vmatpush1.bf16.msra.mxu0 %v710
        %800 = vmatprep.subr.bf16.mxu0 0
        %801 = vmatpush1.bf16.msra.mxu0 %v713
        %802 = vmatprep.subr.bf16.mxu0 0
        %803 = vmatpush1.bf16.msra.mxu0 %v747
        %804 = vmatprep.subr.bf16.mxu0 0
        %805 = vmatpush1.bf16.msra.mxu0 0
        %806 = vmatprep.subr.bf16.mxu0 0
        %807 = vmatpush1.bf16.msra.mxu0 0
        %808 = vmatprep.subr.bf16.mxu0 0
        %809 = vmatpush1.bf16.msra.mxu0 0
        %810 = vmatprep.subr.bf16.mxu0 0
        %811 = vmatpush1.bf16.msra.mxu0 0
        %812 = vmatprep.subr.bf16.mxu0 0
        %813 = vmatpush1.bf16.msra.mxu0 0
        %814 = vmatprep.subr.bf16.mxu0 0
        %815 = vmatpush1.bf16.msra.mxu0 0
        %816 = vmatprep.subr.bf16.mxu0 0
        %817 = vmatpush1.bf16.msra.mxu0 0
        %818 = vmatprep.subr.bf16.mxu0 0
        %819 = vmatpush1.bf16.msra.mxu0 0
        %820 = vmatprep.subr.bf16.mxu0 0
        %821 = vmatpush1.bf16.msra.mxu0 0
        %822 = vmatprep.mubr.bf16.mxu0 0
        %823 = vmatmul.mubr.bf16.gmra.mrb[0].mxu0 %v737
        %v824 = vpop.f32.mrb[0].mxu0
        %v825 = vadd.f32 0.0, %v824
        %v826 = vpop.f32.mrb[0].mxu0
        %v827 = vpop.f32.mrb[0].mxu0
        %v828 = vpop.f32.mrb[0].mxu0
        %829 = vdwg.mxu0
        %s830 = smul.u32 %s172, 3
        %s831 = smul.addr %s830, 8
        %s832 = scalar_lea.vmem %s167, %s831
        %833 = vst [vmem:[%s832] sm:$0xff] %v784
        %834 = vst [vmem:[%s832 + $0x8] sm:$0xff] %v786
        %835 = vst [vmem:[%s832 + $0x10] sm:$0xff] %v825
      $region33: #{spatio_temporal_conv.1} parent=27 // loop_footer
        %s176 = sadd.s32 1, %s172
      $region34: #{spatio_temporal_conv.1} parent=27 // loop_footer_branch
        %171 = sbr.rel target = $region30
      $region35: #{spatio_temporal_conv.1} parent=27 // loop_exit
        _
      %s836 = smul.u32 8, %s18
      %p837 = scmp.lt.s32.totalorder %s17, 1
      %s838 = scalar_select %p837, %s17, 1
      %p839 = scmp.lt.s32.totalorder %s836, 7
      %s840 = scalar_select %p839, %s836, 7
      %s841 = smul.addr %s840, 3
      %s842 = smul.addr %s838, 24
      %s843 = sadd.s32 %s841, %s842
      %s844 = smul.addr %s843, 8
      %s845 = scalar_lea.vmem %s2, %s844
      // Predicated region
      $region36: #{spatio_temporal_conv.1} parent=27 // pred_check
        %p846 = pneg %p92
      $region37: #{spatio_temporal_conv.1} parent=27 // pred_check_branch
        %848 = sbr.rel (%p846) target = $region39
      $region38: #{spatio_temporal_conv.1} parent=27 // pred_region
        %s849 = smul.u32 8, %s18
      $region39: #{spatio_temporal_conv.1} parent=27 // pred_fallthru
        _
    $region28: #{spatio_temporal_conv.1} parent=5 // pred_fallthru
      _
    %p850 = scmp.le.s32.totalorder 2, %s8
    // Predicated region
    $region40: #{spatio_temporal_conv.1} parent=5 // pred_check
      %p851 = pneg %p850
    $region41: #{spatio_temporal_conv.1} parent=5 // pred_check_branch
      %853 = sbr.rel (%p851) target = $region43
    $region42: #{spatio_temporal_conv.1} parent=5 // pred_region
      %s854 = ssub.s32 %s8, 2
      // Predicated region
      $region44: #{spatio_temporal_conv.1} parent=42 // pred_check
        %p855 = pneg %p98
      $region45: #{spatio_temporal_conv.1} parent=42 // pred_check_branch
        %857 = sbr.rel (%p855) target = $region47
      $region46: #{spatio_temporal_conv.1} parent=42 // pred_region
        %s858 = smul.u32 8, %s20
        %p859 = scmp.lt.s32.totalorder %s19, 1
        %s860 = scalar_select %p859, %s19, 1
        %p861 = scmp.lt.s32.totalorder %s858, 7
        %s862 = scalar_select %p861, %s858, 7
        %s863 = smul.addr %s862, 3
        %s864 = smul.addr %s860, 24
        %s865 = sadd.s32 %s863, %s864
        %s866 = smul.addr %s865, 8
        %s867 = scalar_lea.vmem %s2, %s866
      $region47: #{spatio_temporal_conv.1} parent=42 // pred_fallthru
        _
    $region43: #{spatio_temporal_conv.1} parent=5 // pred_fallthru
      _
  $region6: #{spatio_temporal_conv.1} parent=0 // loop_footer
    %s12 = sadd.s32 1, %s8
  $region7: #{spatio_temporal_conv.1} parent=0 // loop_footer_branch
    %7 = sbr.rel target = $region3
  $region8: #{spatio_temporal_conv.1} parent=0 // loop_exit
    _

</llo_original>
